<compile_context>
chip_gen: v5e
topology: v5e:2x2
jax: 0.10.0
libtpu: 0.0.40
codegen_flags: <defaults>
</compile_context>

<pallas_src>
import numpy as np

import jax
import jax.numpy as jnp
from jax.experimental import pallas as pl
from jax.experimental.pallas import tpu as pltpu

# ---------------- configuration (small, consistent with the module) ----------------
VOCAB   = 100   # vocabulary size for the (frozen) embedding table
EMB     = 32    # embedding dim -> Conv1d in_channels
B       = 2     # batch
S       = 16    # sequence length
FILTERS = 32    # Conv1d out_channels per block
MIN_K   = 2
MAX_K   = 4
WINDOWS = tuple(range(MIN_K, MAX_K + 1))         # 3 conv blocks
TARGETS = 11                                     # SemEval-2018 E-c: 11 emotions
CONCAT  = len(WINDOWS) * FILTERS                 # MLP input size (96)
OUT_PAD = 128                                    # lane-dense padded feature / output width

# packed-parameter layout (static offsets, all sublane-tile aligned)
VPAD       = 128                 # one-hot width per tap (>= VOCAB), lane-dense
TBL_ROWS   = MAX_K * VPAD        # rows of the fused (embedding @ conv-tap) matrix  (512)
W1_OFF     = TBL_ROWS            # 512
W2_OFF     = TBL_ROWS + OUT_PAD  # 640
WPACK_ROWS = TBL_ROWS + 2 * OUT_PAD              # 768
B_CONV_ROW, B1_ROW, B2_ROW, MASK_ROW = 0, 8, 16, 24
FPACK_ROWS = MASK_ROW + S                        # 40


# ---------------------------------- Pallas kernel ----------------------------------
def _cnn_kernel(tok_ref, wpack_ref, fpack_ref, out_ref):
    bsz = tok_ref.shape[0]
    seq = tok_ref.shape[1] - (MAX_K - 1)

    # --- per-tap one-hot token codes: pure VPU iota + compare; the concat pieces are
    #     exactly 128 lanes wide, so no cross-lane shuffles are needed ---
    lane = jax.lax.broadcasted_iota(jnp.int32, (bsz, seq, VPAD), 2)
    oh = jnp.concatenate(
        [(tok_ref[:, k:k + seq, :] == lane).astype(jnp.bfloat16) for k in range(MAX_K)],
        axis=-1)                                            # (B, S, MAX_K*VPAD)
    oh = oh.reshape(bsz * seq, MAX_K * VPAD)                # free: seq % sublane tile == 0

    # --- embedding gather + im2col + ALL conv windows/taps in ONE MXU matmul:
    #     (B*S, 512) @ (512, 128), bf16 operands, f32 accumulation ---
    conv = jnp.dot(oh, wpack_ref[0:TBL_ROWS, :],
                   preferred_element_type=jnp.float32)       # (B*S, 128) f32
    conv = jnp.maximum(conv + fpack_ref[B_CONV_ROW:B_CONV_ROW + 1, :], 0.0)  # bias + ReLU

    # --- static per-window validity mask (precomputed constant, one VPU multiply).
    #     NOTE: zero-masking before the max-pool is only correct because ReLU precedes it
    #     (every valid position is >= 0); a non-ReLU activation would need a -inf mask. ---
    conv = conv.reshape(bsz, seq, OUT_PAD) \
        * fpack_ref[MASK_ROW:MASK_ROW + seq, :][None, :, :]
    pooled = jnp.max(conv, axis=1)                           # (B, 128) f32  (= concat feat)

    # --- decision MLP, padded to 128 lanes end-to-end (padded features hit zero W1 rows) ---
    h = jnp.dot(pooled.astype(jnp.bfloat16), wpack_ref[W1_OFF:W1_OFF + OUT_PAD, :],
                preferred_element_type=jnp.float32) + fpack_ref[B1_ROW:B1_ROW + 1, :]
    h = jnp.maximum(h, 0.0)                                  # inner activation: ReLU
    o = jnp.dot(h.astype(jnp.bfloat16), wpack_ref[W2_OFF:W2_OFF + OUT_PAD, :],
                preferred_element_type=jnp.float32) + fpack_ref[B2_ROW:B2_ROW + 1, :]
    out_ref[...] = jax.nn.sigmoid(o)                         # (B, 128) lane-dense store


# ------------------------- one-time (model-load) parameter fusion -------------------------
def fuse_params(params):
    """Fold the embedding table into the conv weights and pack every tensor the kernel
    needs into TWO slabs: a bf16 (768, 128) weight slab and an f32 (40, 128) bias/mask
    slab. Runs ONCE at model load -- nothing here is on the per-call path."""
    emb = np.asarray(params["embeddings"], np.float32)                 # (V, E)
    table_pad = np.zeros((VPAD, EMB), np.float32)
    table_pad[:VOCAB] = emb

    # fused (embedding @ conv tap-k) blocks; smaller windows get zero weight for taps >= w,
    # feature columns padded 96 -> 128 with zeros.
    blocks = []
    for k in range(MAX_K):
        wk = np.zeros((EMB, OUT_PAD), np.float32)
        for i, w in enumerate(WINDOWS):
            if k < w:
                wk[:, i * FILTERS:(i + 1) * FILTERS] = np.asarray(params["conv_w"][i][k])
        blocks.append(table_pad @ wk)                                  # (128, 128)

    w1 = np.zeros((OUT_PAD, OUT_PAD), np.float32)
    w1[:CONCAT, :CONCAT] = np.asarray(params["mlp_w1"])
    w2 = np.zeros((OUT_PAD, OUT_PAD), np.float32)
    w2[:CONCAT, :TARGETS] = np.asarray(params["mlp_w2"])
    wpack = jnp.asarray(np.concatenate(blocks + [w1, w2], axis=0), jnp.bfloat16)  # (768,128)

    fpack = np.zeros((FPACK_ROWS, OUT_PAD), np.float32)
    for i in range(len(WINDOWS)):
        fpack[B_CONV_ROW, i * FILTERS:(i + 1) * FILTERS] = np.asarray(params["conv_b"][i][0])
    fpack[B1_ROW, :CONCAT] = np.asarray(params["mlp_b1"][0])
    fpack[B2_ROW, :TARGETS] = np.asarray(params["mlp_b2"][0])
    for i, w in enumerate(WINDOWS):                                    # static validity mask
        fpack[MASK_ROW:MASK_ROW + (S - w + 1), i * FILTERS:(i + 1) * FILTERS] = 1.0
    return wpack, jnp.asarray(fpack)


# ---------------------------------- per-call wrapper ----------------------------------
@jax.jit
def cnn_forward(x_tokens, wpack, fpack):
    # Only per-call glue: pad the token ids by MAX_K-1 (the padding VALUES are irrelevant —
    # every position that reads them is masked before the max-pool) and add a unit lane dim
    # so the sequence sits on sublanes inside the kernel.
    tok = jnp.pad(x_tokens.astype(jnp.int32), ((0, 0), (0, MAX_K - 1)))[..., None]
    out = pl.pallas_call(
        _cnn_kernel,
        out_shape=jax.ShapeDtypeStruct((x_tokens.shape[0], OUT_PAD), jnp.float32),
        in_specs=[pl.BlockSpec(memory_space=pltpu.MemorySpace.VMEM)] * 3,
        out_specs=pl.BlockSpec(memory_space=pltpu.MemorySpace.VMEM),
    )(tok, wpack, fpack)
    return out[:, :TARGETS]                                            # drop lane padding


# --------------------------- pure-JAX reference (for check) ------------------------
def cnn_reference(x_tokens, params):
    emb = jnp.take(params["embeddings"], x_tokens, axis=0)             # (B, S, E)
    feats = []
    for i, w in enumerate(WINDOWS):
        W = params["conv_w"][i]                                        # (w, E, F)
        bias = params["conv_b"][i]                                     # (1, F)
        L = S - w + 1
        acc = jnp.zeros((emb.shape[0], L, FILTERS), jnp.float32)
        for dk in range(w):
            acc = acc + jnp.einsum("ble,ef->blf", emb[:, dk:dk + L, :], W[dk])
        acc = jax.nn.relu(acc + bias[None, :, :])
        feats.append(jnp.max(acc, axis=1))
    feat = jnp.concatenate(feats, axis=1)                              # (B, CONCAT)
    h = jax.nn.relu(feat @ params["mlp_w1"] + params["mlp_b1"])
    return jax.nn.sigmoid(h @ params["mlp_w2"] + params["mlp_b2"])


# ------------------------------- deterministic params -------------------------------
def init_params(key):
    n = len(WINDOWS)
    keys = jax.random.split(key, 1 + 2 * n + 4)
    p = {}
    p["embeddings"] = 0.1 * jax.random.normal(keys[0], (VOCAB, EMB), jnp.float32)
    p["conv_w"], p["conv_b"] = [], []
    for i, w in enumerate(WINDOWS):
        p["conv_w"].append(0.1 * jax.random.normal(keys[1 + 2 * i], (w, EMB, FILTERS), jnp.float32))
        p["conv_b"].append(0.1 * jax.random.normal(keys[2 + 2 * i], (1, FILTERS), jnp.float32))
    k = 1 + 2 * n
    p["mlp_w1"] = 0.1 * jax.random.normal(keys[k + 0], (CONCAT, CONCAT), jnp.float32)
    p["mlp_b1"] = 0.1 * jax.random.normal(keys[k + 1], (1, CONCAT), jnp.float32)
    p["mlp_w2"] = 0.1 * jax.random.normal(keys[k + 2], (CONCAT, TARGETS), jnp.float32)
    p["mlp_b2"] = 0.1 * jax.random.normal(keys[k + 3], (1, TARGETS), jnp.float32)
    return p


if __name__ == "__main__":
    key = jax.random.PRNGKey(0)
    pkey, xkey = jax.random.split(key)
    params = init_params(pkey)
    x = jax.random.randint(xkey, (B, S), 0, VOCAB, dtype=jnp.int32)    # token indices

    wpack, fpack = fuse_params(params)        # one-time fusion, hoisted off the call path
    out = jax.block_until_ready(cnn_forward(x, wpack, fpack))
    ref = jax.block_until_ready(cnn_reference(x, params))

    assert out.shape == (B, TARGETS), out.shape
    # bf16 matmul operands (f32 accumulation) vs. f32 reference -> loosened tolerance.
    assert jnp.allclose(out, ref, atol=1e-2, rtol=1e-2), float(jnp.max(jnp.abs(out - ref)))

    print("KERNEL_OK")
</pallas_src>

<mosaic_0001>
module attributes {stable_mosaic.version = 11 : i64} {
  func.func @_cnn_kernel(%arg0: memref<2x19x1xi32, #tpu.memory_space<vmem>>, %arg1: memref<768x128xbf16, #tpu.memory_space<vmem>>, %arg2: memref<40x128xf32, #tpu.memory_space<vmem>>, %arg3: memref<2x128xf32, #tpu.memory_space<vmem>>) attributes {dimension_semantics = [], scalar_prefetch = 0 : i64, scratch_operands = 0 : i64, tpu.core_type = #tpu.core_type<tc>} {
    %0 = tpu.iota {dimensions = array<i32: 2>} : vector<2x16x128xi32>
    %c0 = arith.constant 0 : index
    %c0_0 = arith.constant 0 : index
    %c0_1 = arith.constant 0 : index
    %1 = vector.load %arg0[%c0, %c0_0, %c0_1] : memref<2x19x1xi32, #tpu.memory_space<vmem>>, vector<2x16x1xi32>
    %2 = vector.broadcast %1 : vector<2x16x1xi32> to vector<2x16x128xi32>
    %3 = arith.cmpi eq, %2, %0 : vector<2x16x128xi32>
    %4 = arith.extui %3 : vector<2x16x128xi1> to vector<2x16x128xi32>
    %5 = arith.sitofp %4 : vector<2x16x128xi32> to vector<2x16x128xf32>
    %6 = arith.truncf %5 : vector<2x16x128xf32> to vector<2x16x128xbf16>
    %c0_2 = arith.constant 0 : index
    %c1 = arith.constant 1 : index
    %c0_3 = arith.constant 0 : index
    %7 = vector.load %arg0[%c0_2, %c1, %c0_3] : memref<2x19x1xi32, #tpu.memory_space<vmem>>, vector<2x16x1xi32>
    %8 = vector.broadcast %7 : vector<2x16x1xi32> to vector<2x16x128xi32>
    %9 = arith.cmpi eq, %8, %0 : vector<2x16x128xi32>
    %10 = arith.extui %9 : vector<2x16x128xi1> to vector<2x16x128xi32>
    %11 = arith.sitofp %10 : vector<2x16x128xi32> to vector<2x16x128xf32>
    %12 = arith.truncf %11 : vector<2x16x128xf32> to vector<2x16x128xbf16>
    %c0_4 = arith.constant 0 : index
    %c2 = arith.constant 2 : index
    %c0_5 = arith.constant 0 : index
    %13 = vector.load %arg0[%c0_4, %c2, %c0_5] : memref<2x19x1xi32, #tpu.memory_space<vmem>>, vector<2x16x1xi32>
    %14 = vector.broadcast %13 : vector<2x16x1xi32> to vector<2x16x128xi32>
    %15 = arith.cmpi eq, %14, %0 : vector<2x16x128xi32>
    %16 = arith.extui %15 : vector<2x16x128xi1> to vector<2x16x128xi32>
    %17 = arith.sitofp %16 : vector<2x16x128xi32> to vector<2x16x128xf32>
    %18 = arith.truncf %17 : vector<2x16x128xf32> to vector<2x16x128xbf16>
    %c0_6 = arith.constant 0 : index
    %c3 = arith.constant 3 : index
    %c0_7 = arith.constant 0 : index
    %19 = vector.load %arg0[%c0_6, %c3, %c0_7] : memref<2x19x1xi32, #tpu.memory_space<vmem>>, vector<2x16x1xi32>
    %20 = vector.broadcast %19 : vector<2x16x1xi32> to vector<2x16x128xi32>
    %21 = arith.cmpi eq, %20, %0 : vector<2x16x128xi32>
    %22 = arith.extui %21 : vector<2x16x128xi1> to vector<2x16x128xi32>
    %23 = arith.sitofp %22 : vector<2x16x128xi32> to vector<2x16x128xf32>
    %24 = arith.truncf %23 : vector<2x16x128xf32> to vector<2x16x128xbf16>
    %25 = tpu.concatenate %6, %12, %18, %24 in 2 : vector<2x16x128xbf16>, vector<2x16x128xbf16>, vector<2x16x128xbf16>, vector<2x16x128xbf16> -> vector<2x16x512xbf16>
    %26 = vector.shape_cast %25 : vector<2x16x512xbf16> to vector<32x512xbf16>
    %c0_8 = arith.constant 0 : index
    %c0_9 = arith.constant 0 : index
    %27 = vector.load %arg1[%c0_8, %c0_9] : memref<768x128xbf16, #tpu.memory_space<vmem>>, vector<512x128xbf16>
    %cst = arith.constant dense<0.000000e+00> : vector<32x128xf32>
    %28 = tpu.matmul %26, %27, %cst {dimension_numbers = #tpu.dot_dimension_numbers<[1], [0], [0], [1], [0, 0, 1, 1], [], []>} : vector<32x512xbf16>, vector<512x128xbf16>, vector<32x128xf32> -> vector<32x128xf32>
    %c0_10 = arith.constant 0 : index
    %c0_11 = arith.constant 0 : index
    %29 = vector.load %arg2[%c0_10, %c0_11] : memref<40x128xf32, #tpu.memory_space<vmem>>, vector<1x128xf32>
    %30 = vector.broadcast %29 : vector<1x128xf32> to vector<32x128xf32>
    %31 = arith.addf %28, %30 : vector<32x128xf32>
    %cst_12 = arith.constant 0.000000e+00 : f32
    %32 = vector.broadcast %cst_12 : f32 to vector<32x128xf32>
    %33 = arith.maximumf %31, %32 : vector<32x128xf32>
    %34 = vector.shape_cast %33 : vector<32x128xf32> to vector<2x16x128xf32>
    %c24 = arith.constant 24 : index
    %c0_13 = arith.constant 0 : index
    %35 = vector.load %arg2[%c24, %c0_13] : memref<40x128xf32, #tpu.memory_space<vmem>>, vector<16x128xf32>
    %36 = vector.shape_cast %35 : vector<16x128xf32> to vector<1x16x128xf32>
    %37 = vector.broadcast %36 : vector<1x16x128xf32> to vector<2x16x128xf32>
    %38 = arith.mulf %34, %37 : vector<2x16x128xf32>
    %cst_14 = arith.constant dense<0xFF800000> : vector<2x128xf32>
    %39 = vector.multi_reduction <maximumf>, %38, %cst_14 [1] : vector<2x16x128xf32> to vector<2x128xf32>
    %40 = arith.truncf %39 : vector<2x128xf32> to vector<2x128xbf16>
    %c512 = arith.constant 512 : index
    %c0_15 = arith.constant 0 : index
    %41 = vector.load %arg1[%c512, %c0_15] : memref<768x128xbf16, #tpu.memory_space<vmem>>, vector<128x128xbf16>
    %cst_16 = arith.constant dense<0.000000e+00> : vector<2x128xf32>
    %42 = tpu.matmul %40, %41, %cst_16 {dimension_numbers = #tpu.dot_dimension_numbers<[1], [0], [0], [1], [0, 0, 1, 1], [], []>} : vector<2x128xbf16>, vector<128x128xbf16>, vector<2x128xf32> -> vector<2x128xf32>
    %c8 = arith.constant 8 : index
    %c0_17 = arith.constant 0 : index
    %43 = vector.load %arg2[%c8, %c0_17] : memref<40x128xf32, #tpu.memory_space<vmem>>, vector<1x128xf32>
    %44 = vector.broadcast %43 : vector<1x128xf32> to vector<2x128xf32>
    %45 = arith.addf %42, %44 : vector<2x128xf32>
    %cst_18 = arith.constant 0.000000e+00 : f32
    %46 = vector.broadcast %cst_18 : f32 to vector<2x128xf32>
    %47 = arith.maximumf %45, %46 : vector<2x128xf32>
    %48 = arith.truncf %47 : vector<2x128xf32> to vector<2x128xbf16>
    %c640 = arith.constant 640 : index
    %c0_19 = arith.constant 0 : index
    %49 = vector.load %arg1[%c640, %c0_19] : memref<768x128xbf16, #tpu.memory_space<vmem>>, vector<128x128xbf16>
    %cst_20 = arith.constant dense<0.000000e+00> : vector<2x128xf32>
    %50 = tpu.matmul %48, %49, %cst_20 {dimension_numbers = #tpu.dot_dimension_numbers<[1], [0], [0], [1], [0, 0, 1, 1], [], []>} : vector<2x128xbf16>, vector<128x128xbf16>, vector<2x128xf32> -> vector<2x128xf32>
    %c16 = arith.constant 16 : index
    %c0_21 = arith.constant 0 : index
    %51 = vector.load %arg2[%c16, %c0_21] : memref<40x128xf32, #tpu.memory_space<vmem>>, vector<1x128xf32>
    %52 = vector.broadcast %51 : vector<1x128xf32> to vector<2x128xf32>
    %53 = arith.addf %50, %52 : vector<2x128xf32>
    %54 = arith.negf %53 : vector<2x128xf32>
    %55 = math.exp %54 : vector<2x128xf32>
    %cst_22 = arith.constant 1.000000e+00 : f32
    %56 = vector.broadcast %cst_22 : f32 to vector<2x128xf32>
    %57 = arith.addf %56, %55 : vector<2x128xf32>
    %58 = arith.divf %56, %57 : vector<2x128xf32>
    %c0_23 = arith.constant 0 : index
    %c0_24 = arith.constant 0 : index
    %59 = vector.load %arg3[%c0_23, %c0_24] : memref<2x128xf32, #tpu.memory_space<vmem>>, vector<2x128xf32>
    tpu.vector_store %arg3[%c0_23, %c0_24], %58 {strides = array<i32>} : memref<2x128xf32, #tpu.memory_space<vmem>>, vector<2x128xf32>,
    return
  }
}

</mosaic_0001>

<llo_original>
// kernel: cnn_forward.1
$region0: #{cnn_forward.1}
  #allocation0 [shape = 'u32[]', space=smem, size = 0x4, offset = 0x4, fixed_abs, tag = 'smem constant byte address 0x4 - core index']
  #allocation1 [shape = 'u32[72,128]{1,0:T(1,128)}', space=vmem, size = 0x9000, scoped, tag = 'internal scratch']
  %s0 = inlined_call_operand.vmem [shape: s32[2,19,1], index: 0, kind: input, shape index: {}]
  %s1 = inlined_call_operand.hbm [shape: bf16[768,128], index: 1, kind: input, shape index: {}]
  %s2 = inlined_call_operand.vmem [shape: f32[40,128], index: 2, kind: input, shape index: {}]
  %s3 = inlined_call_operand.hbm [shape: f32[2,128], index: 3, kind: output, shape index: {}]
  %s4 = sld [smem:[#allocation0]]
  $region26: #{cnn_forward.1} parent=0
    _
  %s6 = ssub.s32 1, %s4
  %s7 = scalar_select 0, %s6, %s4
  $region1: #{cnn_forward.1} parent=0
    #allocation2 [shape = 'u8[196608]{0}', space=vmem, size = 0x30000, scoped, tag = 'input window, operand 1, single buffered']
    #allocation3 [shape = 's32[1]{0}', space=sflag, size = 0x4, scoped, tag = 'scoped memory for cnn_forward.1']
    #allocation4 [shape = 's32[1]{0}', space=sflag, size = 0x4, scoped, tag = 'scoped memory for cnn_forward.1']
    #allocation5 [shape = 'u8[1024]{0}', space=vmem, size = 0x400, scoped, tag = 'output window, operand 0, single buffered']
    %8 = vsyncpa [#allocation3], 0
    %9 = vsyncpa [#allocation4], 0
    // Predicated region
    $region2: #{cnn_forward.1} parent=1 // pred_check
      _
    $region3: #{cnn_forward.1} parent=1 // pred_check_branch
      %11 = sbr.rel (0) target = $region5
    $region4: #{cnn_forward.1} parent=1 // pred_region
      _
    $region5: #{cnn_forward.1} parent=1 // pred_fallthru
      _
    // Predicated region
    $region6: #{cnn_forward.1} parent=1 // pred_check
      _
    $region7: #{cnn_forward.1} parent=1 // pred_check_branch
      %13 = sbr.rel (0) target = $region9
    $region8: #{cnn_forward.1} parent=1 // pred_region
      %15 = vsyncadd [#allocation3], 0
      %s16 = sshll.u32 %s1, 4
      %s17 = int_to_ptr.hbm [resolvable:$true] %s16
      %s18 = sshll.u32 [#allocation2], 4
      %s19 = int_to_ptr.vmem [resolvable:$true] %s18
      %24 = dma.hbm_to_vmem [thread:$0]  %s17, 6144, %s19, [#allocation3], 64, 64, 4
    $region9: #{cnn_forward.1} parent=1 // pred_fallthru
      _
    // Predicated region
    $region10: #{cnn_forward.1} parent=1 // pred_check
      _
    $region11: #{cnn_forward.1} parent=1 // pred_check_branch
      %26 = sbr.rel (0) target = $region13
    $region12: #{cnn_forward.1} parent=1 // pred_region
      _
    $region13: #{cnn_forward.1} parent=1 // pred_fallthru
      _
    // Predicated region
    $region14: #{cnn_forward.1} parent=1 // pred_check
      _
    $region15: #{cnn_forward.1} parent=1 // pred_check_branch
      %28 = sbr.rel (0) target = $region17
    $region16: #{cnn_forward.1} parent=1 // pred_region
      %30 = dma.done [#allocation3], 6144
    $region17: #{cnn_forward.1} parent=1 // pred_fallthru
      _
    %v31 = vlaneseq
    %v32 = vand.u32 %v31, 127
    %v33 = vld [vmem:[%s0] sm:$0xff]
    %v34 = vld [vmem:[%s0 + $0x8] sm:$0xff]
    %v35 = vld [vmem:[%s0 + $0x18] sm:$0xff]
    %v36 = vld [vmem:[%s0 + $0x20] sm:$0xff]
    %37 = vset.pattern.permute.xlu0 0
    %38 = vperm.xlu0 %37, %v33
    %v39 = vpop.permute.xlu0 %38
    %40 = vset.pattern.permute.xlu0 0
    %41 = vperm.xlu0 %40, %v34
    %v42 = vpop.permute.xlu0 %41
    %43 = vset.pattern.permute.xlu0 0
    %44 = vperm.xlu0 %43, %v35
    %v45 = vpop.permute.xlu0 %44
    %46 = vset.pattern.permute.xlu0 0
    %47 = vperm.xlu0 %46, %v36
    %v48 = vpop.permute.xlu0 %47
    %vm49 = vcmp.eq.s32.totalorder %v39, %v32
    %vm50 = vcmp.eq.s32.totalorder %v42, %v32
    %vm51 = vcmp.eq.s32.totalorder %v45, %v32
    %vm52 = vcmp.eq.s32.totalorder %v48, %v32
    %v53 = vsel %vm49, 1, 0
    %v54 = vsel %vm50, 1, 0
    %v55 = vsel %vm51, 1, 0
    %v56 = vsel %vm52, 1, 0
    %v57 = vcvt.s32.f32 %v53
    %v58 = vcvt.s32.f32 %v54
    %v59 = vcvt.s32.f32 %v55
    %v60 = vcvt.s32.f32 %v56
    %v61 = vpack.c.bf16 %v57, %v57
    %v62 = vpack.c.bf16 %v58, %v58
    %v63 = vpack.c.bf16 %v59, %v59
    %v64 = vpack.c.bf16 %v60, %v60
    %v65 = vld [vmem:[%s0 + $0x1] sm:$0xff]
    %v66 = vld [vmem:[%s0 + $0x9] sm:$0xff]
    %v67 = vld [vmem:[%s0 + $0x19] sm:$0xff]
    %v68 = vld [vmem:[%s0 + $0x21] sm:$0xff]
    %69 = vset.pattern.permute.xlu0 0
    %70 = vperm.xlu0 %69, %v65
    %v71 = vpop.permute.xlu0 %70
    %72 = vset.pattern.permute.xlu0 0
    %73 = vperm.xlu0 %72, %v66
    %v74 = vpop.permute.xlu0 %73
    %75 = vset.pattern.permute.xlu0 0
    %76 = vperm.xlu0 %75, %v67
    %v77 = vpop.permute.xlu0 %76
    %78 = vset.pattern.permute.xlu0 0
    %79 = vperm.xlu0 %78, %v68
    %v80 = vpop.permute.xlu0 %79
    %vm81 = vcmp.eq.s32.totalorder %v71, %v32
    %vm82 = vcmp.eq.s32.totalorder %v74, %v32
    %vm83 = vcmp.eq.s32.totalorder %v77, %v32
    %vm84 = vcmp.eq.s32.totalorder %v80, %v32
    %v85 = vsel %vm81, 1, 0
    %v86 = vsel %vm82, 1, 0
    %v87 = vsel %vm83, 1, 0
    %v88 = vsel %vm84, 1, 0
    %v89 = vcvt.s32.f32 %v85
    %v90 = vcvt.s32.f32 %v86
    %v91 = vcvt.s32.f32 %v87
    %v92 = vcvt.s32.f32 %v88
    %v93 = vpack.c.bf16 %v89, %v89
    %v94 = vpack.c.bf16 %v90, %v90
    %v95 = vpack.c.bf16 %v91, %v91
    %v96 = vpack.c.bf16 %v92, %v92
    %v97 = vld [vmem:[%s0 + $0x2] sm:$0xff]
    %v98 = vld [vmem:[%s0 + $0xa] sm:$0xff]
    %v99 = vld [vmem:[%s0 + $0x1a] sm:$0xff]
    %v100 = vld [vmem:[%s0 + $0x22] sm:$0xff]
    %101 = vset.pattern.permute.xlu0 0
    %102 = vperm.xlu0 %101, %v97
    %v103 = vpop.permute.xlu0 %102
    %104 = vset.pattern.permute.xlu0 0
    %105 = vperm.xlu0 %104, %v98
    %v106 = vpop.permute.xlu0 %105
    %107 = vset.pattern.permute.xlu0 0
    %108 = vperm.xlu0 %107, %v99
    %v109 = vpop.permute.xlu0 %108
    %110 = vset.pattern.permute.xlu0 0
    %111 = vperm.xlu0 %110, %v100
    %v112 = vpop.permute.xlu0 %111
    %vm113 = vcmp.eq.s32.totalorder %v103, %v32
    %vm114 = vcmp.eq.s32.totalorder %v106, %v32
    %vm115 = vcmp.eq.s32.totalorder %v109, %v32
    %vm116 = vcmp.eq.s32.totalorder %v112, %v32
    %v117 = vsel %vm113, 1, 0
    %v118 = vsel %vm114, 1, 0
    %v119 = vsel %vm115, 1, 0
    %v120 = vsel %vm116, 1, 0
    %v121 = vcvt.s32.f32 %v117
    %v122 = vcvt.s32.f32 %v118
    %v123 = vcvt.s32.f32 %v119
    %v124 = vcvt.s32.f32 %v120
    %v125 = vpack.c.bf16 %v121, %v121
    %v126 = vpack.c.bf16 %v122, %v122
    %v127 = vpack.c.bf16 %v123, %v123
    %v128 = vpack.c.bf16 %v124, %v124
    %v129 = vld [vmem:[%s0 + $0x3] sm:$0xff]
    %v130 = vld [vmem:[%s0 + $0xb] sm:$0xff]
    %v131 = vld [vmem:[%s0 + $0x1b] sm:$0xff]
    %v132 = vld [vmem:[%s0 + $0x23] sm:$0xff]
    %133 = vset.pattern.permute.xlu0 0
    %134 = vperm.xlu0 %133, %v129
    %v135 = vpop.permute.xlu0 %134
    %136 = vset.pattern.permute.xlu0 0
    %137 = vperm.xlu0 %136, %v130
    %v138 = vpop.permute.xlu0 %137
    %139 = vset.pattern.permute.xlu0 0
    %140 = vperm.xlu0 %139, %v131
    %v141 = vpop.permute.xlu0 %140
    %142 = vset.pattern.permute.xlu0 0
    %143 = vperm.xlu0 %142, %v132
    %v144 = vpop.permute.xlu0 %143
    %vm145 = vcmp.eq.s32.totalorder %v135, %v32
    %vm146 = vcmp.eq.s32.totalorder %v138, %v32
    %vm147 = vcmp.eq.s32.totalorder %v141, %v32
    %vm148 = vcmp.eq.s32.totalorder %v144, %v32
    %v149 = vsel %vm145, 1, 0
    %v150 = vsel %vm146, 1, 0
    %v151 = vsel %vm147, 1, 0
    %v152 = vsel %vm148, 1, 0
    %v153 = vcvt.s32.f32 %v149
    %v154 = vcvt.s32.f32 %v150
    %v155 = vcvt.s32.f32 %v151
    %v156 = vcvt.s32.f32 %v152
    %v157 = vpack.c.bf16 %v153, %v153
    %v158 = vpack.c.bf16 %v154, %v154
    %v159 = vpack.c.bf16 %v155, %v155
    %v160 = vpack.c.bf16 %v156, %v156
    %v165 = vunpack.c.l.b16 %v61
    %v166 = vunpack.c.l.b16 %v62
    %v167 = vunpack.c.l.b16 %v63
    %v168 = vunpack.c.l.b16 %v64
    %v169 = vpack.c.b16 %v166, %v165
    %v170 = vpack.c.b16 %v168, %v167
    %v177 = vunpack.c.l.b16 %v93
    %v178 = vunpack.c.l.b16 %v94
    %v179 = vunpack.c.l.b16 %v95
    %v180 = vunpack.c.l.b16 %v96
    %v181 = vpack.c.b16 %v178, %v177
    %v182 = vpack.c.b16 %v180, %v179
    %v189 = vunpack.c.l.b16 %v125
    %v190 = vunpack.c.l.b16 %v126
    %v191 = vunpack.c.l.b16 %v127
    %v192 = vunpack.c.l.b16 %v128
    %v193 = vpack.c.b16 %v190, %v189
    %v194 = vpack.c.b16 %v192, %v191
    %v201 = vunpack.c.l.b16 %v157
    %v202 = vunpack.c.l.b16 %v158
    %v203 = vunpack.c.l.b16 %v159
    %v204 = vunpack.c.l.b16 %v160
    %v205 = vpack.c.b16 %v202, %v201
    %v206 = vpack.c.b16 %v204, %v203
    %v209 = vld [vmem:[#allocation2] sm:$0xf]
    %v210 = vld [vmem:[#allocation2 + $0x4] sm:$0xf]
    %v211 = vld [vmem:[#allocation2 + $0x8] sm:$0xf]
    %v212 = vld [vmem:[#allocation2 + $0xc] sm:$0xf]
    %v213 = vld [vmem:[#allocation2 + $0x10] sm:$0xf]
    %v214 = vld [vmem:[#allocation2 + $0x14] sm:$0xf]
    %v215 = vld [vmem:[#allocation2 + $0x18] sm:$0xf]
    %v216 = vld [vmem:[#allocation2 + $0x1c] sm:$0xf]
    %v217 = vld [vmem:[#allocation2 + $0x20] sm:$0xf]
    %v218 = vld [vmem:[#allocation2 + $0x24] sm:$0xf]
    %v219 = vld [vmem:[#allocation2 + $0x28] sm:$0xf]
    %v220 = vld [vmem:[#allocation2 + $0x2c] sm:$0xf]
    %v221 = vld [vmem:[#allocation2 + $0x30] sm:$0xf]
    %v222 = vld [vmem:[#allocation2 + $0x34] sm:$0xf]
    %v223 = vld [vmem:[#allocation2 + $0x38] sm:$0xf]
    %v224 = vld [vmem:[#allocation2 + $0x3c] sm:$0xf]
    %v225 = vld [vmem:[#allocation2 + $0x40] sm:$0xf]
    %v226 = vld [vmem:[#allocation2 + $0x44] sm:$0xf]
    %v227 = vld [vmem:[#allocation2 + $0x48] sm:$0xf]
    %v228 = vld [vmem:[#allocation2 + $0x4c] sm:$0xf]
    %v229 = vld [vmem:[#allocation2 + $0x50] sm:$0xf]
    %v230 = vld [vmem:[#allocation2 + $0x54] sm:$0xf]
    %v231 = vld [vmem:[#allocation2 + $0x58] sm:$0xf]
    %v232 = vld [vmem:[#allocation2 + $0x5c] sm:$0xf]
    %v233 = vld [vmem:[#allocation2 + $0x60] sm:$0xf]
    %v234 = vld [vmem:[#allocation2 + $0x64] sm:$0xf]
    %v235 = vld [vmem:[#allocation2 + $0x68] sm:$0xf]
    %v236 = vld [vmem:[#allocation2 + $0x6c] sm:$0xf]
    %v237 = vld [vmem:[#allocation2 + $0x70] sm:$0xf]
    %v238 = vld [vmem:[#allocation2 + $0x74] sm:$0xf]
    %v239 = vld [vmem:[#allocation2 + $0x78] sm:$0xf]
    %v240 = vld [vmem:[#allocation2 + $0x7c] sm:$0xf]
    %v241 = vld [vmem:[#allocation2 + $0x80] sm:$0xf]
    %v242 = vld [vmem:[#allocation2 + $0x84] sm:$0xf]
    %v243 = vld [vmem:[#allocation2 + $0x88] sm:$0xf]
    %v244 = vld [vmem:[#allocation2 + $0x8c] sm:$0xf]
    %v245 = vld [vmem:[#allocation2 + $0x90] sm:$0xf]
    %v246 = vld [vmem:[#allocation2 + $0x94] sm:$0xf]
    %v247 = vld [vmem:[#allocation2 + $0x98] sm:$0xf]
    %v248 = vld [vmem:[#allocation2 + $0x9c] sm:$0xf]
    %v249 = vld [vmem:[#allocation2 + $0xa0] sm:$0xf]
    %v250 = vld [vmem:[#allocation2 + $0xa4] sm:$0xf]
    %v251 = vld [vmem:[#allocation2 + $0xa8] sm:$0xf]
    %v252 = vld [vmem:[#allocation2 + $0xac] sm:$0xf]
    %v253 = vld [vmem:[#allocation2 + $0xb0] sm:$0xf]
    %v254 = vld [vmem:[#allocation2 + $0xb4] sm:$0xf]
    %v255 = vld [vmem:[#allocation2 + $0xb8] sm:$0xf]
    %v256 = vld [vmem:[#allocation2 + $0xbc] sm:$0xf]
    %v257 = vld [vmem:[#allocation2 + $0xc0] sm:$0xf]
    %v258 = vld [vmem:[#allocation2 + $0xc4] sm:$0xf]
    %v259 = vld [vmem:[#allocation2 + $0xc8] sm:$0xf]
    %v260 = vld [vmem:[#allocation2 + $0xcc] sm:$0xf]
    %v261 = vld [vmem:[#allocation2 + $0xd0] sm:$0xf]
    %v262 = vld [vmem:[#allocation2 + $0xd4] sm:$0xf]
    %v263 = vld [vmem:[#allocation2 + $0xd8] sm:$0xf]
    %v264 = vld [vmem:[#allocation2 + $0xdc] sm:$0xf]
    %v265 = vld [vmem:[#allocation2 + $0xe0] sm:$0xf]
    %v266 = vld [vmem:[#allocation2 + $0xe4] sm:$0xf]
    %v267 = vld [vmem:[#allocation2 + $0xe8] sm:$0xf]
    %v268 = vld [vmem:[#allocation2 + $0xec] sm:$0xf]
    %v269 = vld [vmem:[#allocation2 + $0xf0] sm:$0xf]
    %v270 = vld [vmem:[#allocation2 + $0xf4] sm:$0xf]
    %v271 = vld [vmem:[#allocation2 + $0xf8] sm:$0xf]
    %v272 = vld [vmem:[#allocation2 + $0xfc] sm:$0xf]
    %v273 = vld [vmem:[%s2] sm:$0x1]
    %v274 = vperm.slane %v273, 0
    %v339 = vunpack.c.l.b16 %v209
    %v340 = vunpack.c.l.b16 %v210
    %v341 = vunpack.c.l.b16 %v211
    %v342 = vunpack.c.l.b16 %v212
    %v343 = vunpack.c.l.b16 %v213
    %v344 = vunpack.c.l.b16 %v214
    %v345 = vunpack.c.l.b16 %v215
    %v346 = vunpack.c.l.b16 %v216
    %v347 = vunpack.c.l.b16 %v217
    %v348 = vunpack.c.l.b16 %v218
    %v349 = vunpack.c.l.b16 %v219
    %v350 = vunpack.c.l.b16 %v220
    %v351 = vunpack.c.l.b16 %v221
    %v352 = vunpack.c.l.b16 %v222
    %v353 = vunpack.c.l.b16 %v223
    %v354 = vunpack.c.l.b16 %v224
    %v355 = vunpack.c.l.b16 %v225
    %v356 = vunpack.c.l.b16 %v226
    %v357 = vunpack.c.l.b16 %v227
    %v358 = vunpack.c.l.b16 %v228
    %v359 = vunpack.c.l.b16 %v229
    %v360 = vunpack.c.l.b16 %v230
    %v361 = vunpack.c.l.b16 %v231
    %v362 = vunpack.c.l.b16 %v232
    %v363 = vunpack.c.l.b16 %v233
    %v364 = vunpack.c.l.b16 %v234
    %v365 = vunpack.c.l.b16 %v235
    %v366 = vunpack.c.l.b16 %v236
    %v367 = vunpack.c.l.b16 %v237
    %v368 = vunpack.c.l.b16 %v238
    %v369 = vunpack.c.l.b16 %v239
    %v370 = vunpack.c.l.b16 %v240
    %v371 = vunpack.c.l.b16 %v241
    %v372 = vunpack.c.l.b16 %v242
    %v373 = vunpack.c.l.b16 %v243
    %v374 = vunpack.c.l.b16 %v244
    %v375 = vunpack.c.l.b16 %v245
    %v376 = vunpack.c.l.b16 %v246
    %v377 = vunpack.c.l.b16 %v247
    %v378 = vunpack.c.l.b16 %v248
    %v379 = vunpack.c.l.b16 %v249
    %v380 = vunpack.c.l.b16 %v250
    %v381 = vunpack.c.l.b16 %v251
    %v382 = vunpack.c.l.b16 %v252
    %v383 = vunpack.c.l.b16 %v253
    %v384 = vunpack.c.l.b16 %v254
    %v385 = vunpack.c.l.b16 %v255
    %v386 = vunpack.c.l.b16 %v256
    %v387 = vunpack.c.l.b16 %v257
    %v388 = vunpack.c.l.b16 %v258
    %v389 = vunpack.c.l.b16 %v259
    %v390 = vunpack.c.l.b16 %v260
    %v391 = vunpack.c.l.b16 %v261
    %v392 = vunpack.c.l.b16 %v262
    %v393 = vunpack.c.l.b16 %v263
    %v394 = vunpack.c.l.b16 %v264
    %v395 = vunpack.c.l.b16 %v265
    %v396 = vunpack.c.l.b16 %v266
    %v397 = vunpack.c.l.b16 %v267
    %v398 = vunpack.c.l.b16 %v268
    %v399 = vunpack.c.l.b16 %v269
    %v400 = vunpack.c.l.b16 %v270
    %v401 = vunpack.c.l.b16 %v271
    %v402 = vunpack.c.l.b16 %v272
    %v403 = vpack.c.b16 %v340, %v339
    %v404 = vpack.c.b16 %v342, %v341
    %v405 = vpack.c.b16 %v344, %v343
    %v406 = vpack.c.b16 %v346, %v345
    %v407 = vpack.c.b16 %v348, %v347
    %v408 = vpack.c.b16 %v350, %v349
    %v409 = vpack.c.b16 %v352, %v351
    %v410 = vpack.c.b16 %v354, %v353
    %v411 = vpack.c.b16 %v356, %v355
    %v412 = vpack.c.b16 %v358, %v357
    %v413 = vpack.c.b16 %v360, %v359
    %v414 = vpack.c.b16 %v362, %v361
    %v415 = vpack.c.b16 %v364, %v363
    %v416 = vpack.c.b16 %v366, %v365
    %v417 = vpack.c.b16 %v368, %v367
    %v418 = vpack.c.b16 %v370, %v369
    %v419 = vpack.c.b16 %v372, %v371
    %v420 = vpack.c.b16 %v374, %v373
    %v421 = vpack.c.b16 %v376, %v375
    %v422 = vpack.c.b16 %v378, %v377
    %v423 = vpack.c.b16 %v380, %v379
    %v424 = vpack.c.b16 %v382, %v381
    %v425 = vpack.c.b16 %v384, %v383
    %v426 = vpack.c.b16 %v386, %v385
    %v427 = vpack.c.b16 %v388, %v387
    %v428 = vpack.c.b16 %v390, %v389
    %v429 = vpack.c.b16 %v392, %v391
    %v430 = vpack.c.b16 %v394, %v393
    %v431 = vpack.c.b16 %v396, %v395
    %v432 = vpack.c.b16 %v398, %v397
    %v433 = vpack.c.b16 %v400, %v399
    %v434 = vpack.c.b16 %v402, %v401
    %467 = vmatpush.bf16.msra.mxu0 %v410
    %468 = vmatpush.bf16.msra.mxu0 %v409
    %469 = vmatpush.bf16.msra.mxu0 %v408
    %470 = vmatpush.bf16.msra.mxu0 %v407
    %471 = vmatpush.bf16.msra.mxu0 %v406
    %472 = vmatpush.bf16.msra.mxu0 %v405
    %473 = vmatpush.bf16.msra.mxu0 %v404
    %474 = vmatpush.bf16.msra.mxu0 %v403
    %475 = vmatmul.bf16.gmra.mxu0 %v169
    %v476 = vpop.f32.mrf.mxu0
    %v477 = vadd.f32 %v274, %v476
    %v478 = vpop.f32.mrf.mxu0
    %v479 = vadd.f32 %v274, %v478
    %480 = vmatmul.bf16.gmra.mxu0 %v170
    %v481 = vpop.f32.mrf.mxu0
    %v482 = vadd.f32 %v274, %v481
    %v483 = vpop.f32.mrf.mxu0
    %v484 = vadd.f32 %v274, %v483
    %485 = vdwg.mxu0
    %486 = vmatpush.bf16.msra.mxu0 %v418
    %487 = vmatpush.bf16.msra.mxu0 %v417
    %488 = vmatpush.bf16.msra.mxu0 %v416
    %489 = vmatpush.bf16.msra.mxu0 %v415
    %490 = vmatpush.bf16.msra.mxu0 %v414
    %491 = vmatpush.bf16.msra.mxu0 %v413
    %492 = vmatpush.bf16.msra.mxu0 %v412
    %493 = vmatpush.bf16.msra.mxu0 %v411
    %494 = vmatmul.bf16.gmra.mxu0 %v181
    %v495 = vpop.f32.mrf.mxu0
    %v496 = vadd.f32 %v477, %v495
    %v497 = vpop.f32.mrf.mxu0
    %v498 = vadd.f32 %v479, %v497
    %499 = vmatmul.bf16.gmra.mxu0 %v182
    %v500 = vpop.f32.mrf.mxu0
    %v501 = vadd.f32 %v482, %v500
    %v502 = vpop.f32.mrf.mxu0
    %v503 = vadd.f32 %v484, %v502
    %504 = vdwg.mxu0
    %505 = vmatpush.bf16.msra.mxu0 %v426
    %506 = vmatpush.bf16.msra.mxu0 %v425
    %507 = vmatpush.bf16.msra.mxu0 %v424
    %508 = vmatpush.bf16.msra.mxu0 %v423
    %509 = vmatpush.bf16.msra.mxu0 %v422
    %510 = vmatpush.bf16.msra.mxu0 %v421
    %511 = vmatpush.bf16.msra.mxu0 %v420
    %512 = vmatpush.bf16.msra.mxu0 %v419
    %513 = vmatmul.bf16.gmra.mxu0 %v193
    %v514 = vpop.f32.mrf.mxu0
    %v515 = vadd.f32 %v496, %v514
    %v516 = vpop.f32.mrf.mxu0
    %v517 = vadd.f32 %v498, %v516
    %518 = vmatmul.bf16.gmra.mxu0 %v194
    %v519 = vpop.f32.mrf.mxu0
    %v520 = vadd.f32 %v501, %v519
    %v521 = vpop.f32.mrf.mxu0
    %v522 = vadd.f32 %v503, %v521
    %523 = vdwg.mxu0
    %524 = vmatpush.bf16.msra.mxu0 %v434
    %525 = vmatpush.bf16.msra.mxu0 %v433
    %526 = vmatpush.bf16.msra.mxu0 %v432
    %527 = vmatpush.bf16.msra.mxu0 %v431
    %528 = vmatpush.bf16.msra.mxu0 %v430
    %529 = vmatpush.bf16.msra.mxu0 %v429
    %530 = vmatpush.bf16.msra.mxu0 %v428
    %531 = vmatpush.bf16.msra.mxu0 %v427
    %532 = vmatmul.bf16.gmra.mxu0 %v205
    %v533 = vpop.f32.mrf.mxu0
    %v534 = vadd.f32 %v515, %v533
    %v535 = vpop.f32.mrf.mxu0
    %v536 = vadd.f32 %v517, %v535
    %537 = vmatmul.bf16.gmra.mxu0 %v206
    %v538 = vpop.f32.mrf.mxu0
    %v539 = vadd.f32 %v520, %v538
    %v540 = vpop.f32.mrf.mxu0
    %v541 = vadd.f32 %v522, %v540
    %542 = vdwg.mxu0
    %v543 = vmax.f32 %v534, 0.0
    %v544 = vmax.f32 %v536, 0.0
    %v545 = vmax.f32 %v539, 0.0
    %v546 = vmax.f32 %v541, 0.0
    %v547 = vld [vmem:[%s2 + $0x18] sm:$0xff]
    %v548 = vld [vmem:[%s2 + $0x20] sm:$0xff]
    %v549 = vmul.f32 %v543, %v547
    %v550 = vmul.f32 %v544, %v548
    %v551 = vmul.f32 %v545, %v547
    %v552 = vmul.f32 %v546, %v548
    %v553 = vmax.f32 %v549, %v550
    %v554 = vrot.slane %v553, 4
    %v555 = vmax.f32 %v553, %v554
    %v556 = vrot.slane %v555, 2
    %v557 = vmax.f32 %v555, %v556
    %v558 = vrot.slane %v557, 1
    %v559 = vmax.f32 %v557, %v558
    %v560 = vmax.f32 %v551, %v552
    %v561 = vrot.slane %v560, 4
    %v562 = vmax.f32 %v560, %v561
    %v563 = vrot.slane %v562, 2
    %v564 = vmax.f32 %v562, %v563
    %v565 = vrot.slane %v564, 1
    %v566 = vmax.f32 %v564, %v565
    %v567 = vpack.c.bf16 %v559, %v559
    %v568 = vpack.c.bf16 %v566, %v566
    %v569 = vld [vmem:[#allocation2 + $0x100] sm:$0xf]
    %v570 = vld [vmem:[#allocation2 + $0x104] sm:$0xf]
    %v571 = vld [vmem:[#allocation2 + $0x108] sm:$0xf]
    %v572 = vld [vmem:[#allocation2 + $0x10c] sm:$0xf]
    %v573 = vld [vmem:[#allocation2 + $0x110] sm:$0xf]
    %v574 = vld [vmem:[#allocation2 + $0x114] sm:$0xf]
    %v575 = vld [vmem:[#allocation2 + $0x118] sm:$0xf]
    %v576 = vld [vmem:[#allocation2 + $0x11c] sm:$0xf]
    %v577 = vld [vmem:[#allocation2 + $0x120] sm:$0xf]
    %v578 = vld [vmem:[#allocation2 + $0x124] sm:$0xf]
    %v579 = vld [vmem:[#allocation2 + $0x128] sm:$0xf]
    %v580 = vld [vmem:[#allocation2 + $0x12c] sm:$0xf]
    %v581 = vld [vmem:[#allocation2 + $0x130] sm:$0xf]
    %v582 = vld [vmem:[#allocation2 + $0x134] sm:$0xf]
    %v583 = vld [vmem:[#allocation2 + $0x138] sm:$0xf]
    %v584 = vld [vmem:[#allocation2 + $0x13c] sm:$0xf]
    %v585 = vld [vmem:[%s2 + $0x8] sm:$0x1]
    %v586 = vperm.slane %v585, 0
    %v589 = vunpack.c.l.b16 %v567
    %v590 = vunpack.c.l.b16 %v568
    %vm591 = vcmask 1041409
    %v592 = vsel %vm591, %v590, %v589
    %v593 = vpack.c.b16 %v592, %v592
    %v611 = vunpack.c.l.b16 %v569
    %v612 = vunpack.c.l.b16 %v570
    %v613 = vunpack.c.l.b16 %v571
    %v614 = vunpack.c.l.b16 %v572
    %v615 = vunpack.c.l.b16 %v573
    %v616 = vunpack.c.l.b16 %v574
    %v617 = vunpack.c.l.b16 %v575
    %v618 = vunpack.c.l.b16 %v576
    %v619 = vunpack.c.l.b16 %v577
    %v620 = vunpack.c.l.b16 %v578
    %v621 = vunpack.c.l.b16 %v579
    %v622 = vunpack.c.l.b16 %v580
    %v623 = vunpack.c.l.b16 %v581
    %v624 = vunpack.c.l.b16 %v582
    %v625 = vunpack.c.l.b16 %v583
    %v626 = vunpack.c.l.b16 %v584
    %v627 = vpack.c.b16 %v612, %v611
    %v628 = vpack.c.b16 %v614, %v613
    %v629 = vpack.c.b16 %v616, %v615
    %v630 = vpack.c.b16 %v618, %v617
    %v631 = vpack.c.b16 %v620, %v619
    %v632 = vpack.c.b16 %v622, %v621
    %v633 = vpack.c.b16 %v624, %v623
    %v634 = vpack.c.b16 %v626, %v625
    %643 = vmatpush.bf16.msra.mxu0 %v634
    %644 = vmatpush.bf16.msra.mxu0 %v633
    %645 = vmatpush.bf16.msra.mxu0 %v632
    %646 = vmatpush.bf16.msra.mxu0 %v631
    %647 = vmatpush.bf16.msra.mxu0 %v630
    %648 = vmatpush.bf16.msra.mxu0 %v629
    %649 = vmatpush.bf16.msra.mxu0 %v628
    %650 = vmatpush.bf16.msra.mxu0 %v627
    %651 = vmatmul.bf16.gmra.mxu0 %v593
    %v652 = vpop.f32.mrf.mxu0
    %v653 = vadd.f32 %v586, %v652
    %v654 = vpop.f32.mrf.mxu0
    %655 = vdwg.mxu0
    %v656 = vmax.f32 %v653, 0.0
    %v657 = vpack.c.bf16 %v656, %v656
    %v658 = vld [vmem:[#allocation2 + $0x140] sm:$0xf]
    %v659 = vld [vmem:[#allocation2 + $0x144] sm:$0xf]
    %v660 = vld [vmem:[#allocation2 + $0x148] sm:$0xf]
    %v661 = vld [vmem:[#allocation2 + $0x14c] sm:$0xf]
    %v662 = vld [vmem:[#allocation2 + $0x150] sm:$0xf]
    %v663 = vld [vmem:[#allocation2 + $0x154] sm:$0xf]
    %v664 = vld [vmem:[#allocation2 + $0x158] sm:$0xf]
    %v665 = vld [vmem:[#allocation2 + $0x15c] sm:$0xf]
    %v666 = vld [vmem:[#allocation2 + $0x160] sm:$0xf]
    %v667 = vld [vmem:[#allocation2 + $0x164] sm:$0xf]
    %v668 = vld [vmem:[#allocation2 + $0x168] sm:$0xf]
    %v669 = vld [vmem:[#allocation2 + $0x16c] sm:$0xf]
    %v670 = vld [vmem:[#allocation2 + $0x170] sm:$0xf]
    %v671 = vld [vmem:[#allocation2 + $0x174] sm:$0xf]
    %v672 = vld [vmem:[#allocation2 + $0x178] sm:$0xf]
    %v673 = vld [vmem:[#allocation2 + $0x17c] sm:$0xf]
    %v674 = vld [vmem:[%s2 + $0x10] sm:$0x1]
    %v675 = vperm.slane %v674, 0
    %v692 = vunpack.c.l.b16 %v658
    %v693 = vunpack.c.l.b16 %v659
    %v694 = vunpack.c.l.b16 %v660
    %v695 = vunpack.c.l.b16 %v661
    %v696 = vunpack.c.l.b16 %v662
    %v697 = vunpack.c.l.b16 %v663
    %v698 = vunpack.c.l.b16 %v664
    %v699 = vunpack.c.l.b16 %v665
    %v700 = vunpack.c.l.b16 %v666
    %v701 = vunpack.c.l.b16 %v667
    %v702 = vunpack.c.l.b16 %v668
    %v703 = vunpack.c.l.b16 %v669
    %v704 = vunpack.c.l.b16 %v670
    %v705 = vunpack.c.l.b16 %v671
    %v706 = vunpack.c.l.b16 %v672
    %v707 = vunpack.c.l.b16 %v673
    %v708 = vpack.c.b16 %v693, %v692
    %v709 = vpack.c.b16 %v695, %v694
    %v710 = vpack.c.b16 %v697, %v696
    %v711 = vpack.c.b16 %v699, %v698
    %v712 = vpack.c.b16 %v701, %v700
    %v713 = vpack.c.b16 %v703, %v702
    %v714 = vpack.c.b16 %v705, %v704
    %v715 = vpack.c.b16 %v707, %v706
    %724 = vmatpush.bf16.msra.mxu0 %v715
    %725 = vmatpush.bf16.msra.mxu0 %v714
    %726 = vmatpush.bf16.msra.mxu0 %v713
    %727 = vmatpush.bf16.msra.mxu0 %v712
    %728 = vmatpush.bf16.msra.mxu0 %v711
    %729 = vmatpush.bf16.msra.mxu0 %v710
    %730 = vmatpush.bf16.msra.mxu0 %v709
    %731 = vmatpush.bf16.msra.mxu0 %v708
    %732 = vmatmul.bf16.gmra.mxu0 %v657
    %v733 = vpop.f32.mrf.mxu0
    %v734 = vadd.f32 %v675, %v733
    %v735 = vpop.f32.mrf.mxu0
    %736 = vdwg.mxu0
    %v737 = vxor.u32 %v734, 2147483648
    %v738 = vmul.f32 %v737, 1.442695
    %v739 = vpow.pop %v738
    %v740 = vadd.f32 %v739, 1.0
    %v741 = vrcp.pop %v740
    %v742 = vmul.f32 %v740, %v741
    %v743 = vsub.f32 1.0, %v742
    %v744 = vmul.f32 %v741, %v743
    %v745 = vadd.f32 %v741, %v744
    %vm746 = vweird.f32 %v740
    %vm747 = vweird.f32 %v741
    %vm748 = vmor %vm746, %vm747
    %v749 = vsel %vm748, %v741, %v745
    %v750 = vand.u32 2147483647, %v740
    %vm751 = vcmp.eq.f32.partialorder %v750, 8.507059e+37
    %v752 = vand.u32 %v740, 2147483648
    %v753 = vor.u32 1.1754944e-38, %v752
    %v754 = vsel %vm751, %v753, %v749
    %v755 = vmul.f32 1.0, %v754
    %756 = vst [vmem:[#allocation5] sm:$0x3] %v755
    // Predicated region
    $region18: #{cnn_forward.1} parent=1 // pred_check
      _
    $region19: #{cnn_forward.1} parent=1 // pred_check_branch
      %758 = sbr.rel (0) target = $region21
    $region20: #{cnn_forward.1} parent=1 // pred_region
      %760 = vsyncadd [#allocation4], 0
      %s762 = sshll.u32 [#allocation5], 4
      %s763 = int_to_ptr.vmem [resolvable:$true] %s762
      %s764 = sshll.u32 %s3, 4
      %s765 = int_to_ptr.hbm [resolvable:$true] %s764
      %767 = dma.vmem_to_hbm [thread:$0]  %s763, 32, %s765, [#allocation4]
    $region21: #{cnn_forward.1} parent=1 // pred_fallthru
      _
    // Predicated region
    $region22: #{cnn_forward.1} parent=1 // pred_check
      _
    $region23: #{cnn_forward.1} parent=1 // pred_check_branch
      %769 = sbr.rel (0) target = $region25
    $region24: #{cnn_forward.1} parent=1 // pred_region
      %771 = dma.done [#allocation4], 32
    $region25: #{cnn_forward.1} parent=1 // pred_fallthru
      _
    %772 = vsyncpa [#allocation3], 1
    %773 = vsyncpa [#allocation4], 1

</llo_original>
